<compile_context>
chip_gen: v7x
topology: tpu7x:2x2x1
jax: 0.10.0
libtpu: 0.0.40
codegen_flags: <defaults>
</compile_context>

<pallas_src>
import functools
import math

import numpy as np
import jax
import jax.numpy as jnp
from jax.experimental import pallas as pl
from jax.experimental.pallas import tpu as pltpu


def _cdiv(a, b):
    return -(-a // b)


def _round_up(a, b):
    return _cdiv(a, b) * b


def _ln_epilogue(xc, var, w, b, eps, out_dtype):
    y = xc * jax.lax.rsqrt(var + jnp.float32(eps))
    return (y * w + b).astype(out_dtype)


def _ln_kernel_plain(x_ref, wb_ref, o_ref, *, eps, h):
    """(tile_rows, h) tile; layer norm over the full lane axis (k == 1)."""
    x = x_ref[...].astype(jnp.float32)
    w = wb_ref[0:1, :]
    b = wb_ref[1:2, :]
    inv_h = jnp.float32(1.0 / h)
    mean = jnp.sum(x, axis=-1, keepdims=True) * inv_h
    xc = x - mean
    var = jnp.sum(xc * xc, axis=-1, keepdims=True) * inv_h
    o_ref[...] = _ln_epilogue(xc, var, w, b, eps, o_ref.dtype)


def _ln_kernel_packed(x_ref, wb_ref, j_ref, o_ref, *, eps, h):
    """(tile_rows, hp) tile with k = hp // h logical rows packed per register.

    Segment sums go through the MXU: s = x @ J with J block-diagonal ones, so
    the result already carries the per-segment broadcast and the epilogue is
    pure elementwise VPU work.  precision=HIGHEST keeps the f32 operand exact
    (default TPU dot precision would round x to bf16 and degrade mean/var).
    """
    x = x_ref[...].astype(jnp.float32)
    w = wb_ref[0:1, :]
    b = wb_ref[1:2, :]
    j = j_ref[...]
    inv_h = jnp.float32(1.0 / h)
    s1 = jnp.dot(x, j, precision=jax.lax.Precision.HIGHEST,
                 preferred_element_type=jnp.float32)
    mean = s1 * inv_h
    xc = x - mean
    s2 = jnp.dot(xc * xc, j, precision=jax.lax.Precision.HIGHEST,
                 preferred_element_type=jnp.float32)
    var = s2 * inv_h
    o_ref[...] = _ln_epilogue(xc, var, w, b, eps, o_ref.dtype)


def dp_layer_norm_forward(x, weight, bias, eps=1e-5):
    """Pallas layer norm over the trailing `weight.ndim` dims of x."""
    normalized_shape = weight.shape
    h = math.prod(normalized_shape)
    lead_shape = x.shape[: x.ndim - len(normalized_shape)]
    rows = math.prod(lead_shape) if lead_shape else 1

    # --- lane packing for small H (zero-copy: reshape is a row-major view) ---
    if h < 128 and 128 % h == 0 and rows % (128 // h) == 0:
        k = 128 // h
    else:
        k = 1
    # TODO(synk): generalize packing to H < 128 that does not divide 128
    # (hp = lcm(H, 128)) using a rank-k segment sum to keep the MXU cost flat.
    hp = h * k
    packed_rows = rows // k

    x2 = x.reshape(packed_rows, hp)  # free view, no HBM traffic

    # --- fused, pre-cast affine params: one resident (2, hp) f32 block -------
    w_row = jnp.tile(weight.reshape(1, h).astype(jnp.float32), (1, k))
    b_row = jnp.tile(bias.reshape(1, h).astype(jnp.float32), (1, k))
    wb = jnp.concatenate([w_row, b_row], axis=0)

    # --- tile sizing (generation aware) --------------------------------------
    itemsize = jnp.dtype(x.dtype).itemsize
    sub = max(8, 32 // itemsize)          # sublane rounding: 8 f32 / 16 bf16 / 32 int8
    vmem_cap_bytes = 64 * 1024 * 1024     # conservative default (v7x per-core)
    try:
        info = pltpu.get_tpu_info()
        vmem_cap_bytes = int(getattr(info, "vmem_capacity_bytes", vmem_cap_bytes))
    except Exception:
        pass
    vmem_limit_bytes = min((vmem_cap_bytes * 3) // 4, 96 * 1024 * 1024)
    # Live VMEM per tile element: double-buffered in + out blocks plus ~8
    # tile-sized f32 intermediates (counted at 4 B regardless of input dtype).
    per_elem_live = 4 * itemsize + 8 * 4
    max_tile_elems = max(sub * hp, (vmem_limit_bytes // 2) // per_elem_live)
    max_tile_rows = max(sub, (max_tile_elems // hp) // sub * sub)
    # ~1-2 MiB blocks already sit at the HBM roofline; bigger buys nothing.
    target_elems = min(max_tile_elems, (2 * 1024 * 1024) // itemsize)

    tile_rows = max(sub, (target_elems // hp) // sub * sub)
    # Prefer >= 8 grid steps (>= 4 per TensorCore on v7x) so DMAs double-buffer
    # against compute on every generation.
    if packed_rows >= 8 * sub:
        tile_rows = min(tile_rows, _round_up(_cdiv(packed_rows, 8), sub))
    tile_rows = min(tile_rows, _round_up(packed_rows, sub))
    num_tiles = _cdiv(packed_rows, tile_rows)
    # v7x: keep the parallel axis even so both TensorCores stay busy.
    if num_tiles > 2 and num_tiles % 2 == 1:
        cand = _round_up(_cdiv(packed_rows, num_tiles - 1), sub)
        if cand <= max_tile_rows and _cdiv(packed_rows, cand) % 2 == 0:
            tile_rows = cand
            num_tiles = _cdiv(packed_rows, cand)
    # No padding / slicing: the ragged final row block is clipped by Pallas
    # (garbage reads stay in their own rows; OOB writes are dropped).

    x_spec = pl.BlockSpec((tile_rows, hp), lambda i: (i, 0))
    wb_spec = pl.BlockSpec((2, hp), lambda i: (0, 0))
    out_spec = pl.BlockSpec((tile_rows, hp), lambda i: (i, 0))

    if k > 1:
        seg = np.arange(hp) // h
        j_mat = jnp.asarray((seg[:, None] == seg[None, :]).astype(np.float32))
        kernel = functools.partial(_ln_kernel_packed, eps=float(eps), h=h)
        operands = (x2, wb, j_mat)
        in_specs = [x_spec, wb_spec, pl.BlockSpec((hp, hp), lambda i: (0, 0))]
    else:
        kernel = functools.partial(_ln_kernel_plain, eps=float(eps), h=h)
        operands = (x2, wb)
        in_specs = [x_spec, wb_spec]

    out = pl.pallas_call(
        kernel,
        out_shape=jax.ShapeDtypeStruct((packed_rows, hp), x.dtype),
        grid_spec=pltpu.PrefetchScalarGridSpec(
            num_scalar_prefetch=0,
            grid=(num_tiles,),
            in_specs=in_specs,
            out_specs=out_spec,
        ),
        compiler_params=pltpu.CompilerParams(
            dimension_semantics=("parallel",),
            vmem_limit_bytes=int(vmem_limit_bytes),
        ),
    )(*operands)

    return out.reshape(x.shape)


# TODO(synk): the DP backward (per-sample grad clipping + Gaussian noise) is
# training-only machinery and is not part of this forward kernel.


if __name__ == "__main__":
    def ref_ln(x, w, b, eps):
        xf = x.astype(jnp.float32)
        mean = jnp.mean(xf, axis=-1, keepdims=True)
        var = jnp.mean((xf - mean) ** 2, axis=-1, keepdims=True)
        return ((xf - mean) / jnp.sqrt(var + eps) * w + b).astype(x.dtype)

    eps = 1e-5
    key = jax.random.PRNGKey(0)
    k0, k1, k2, k3, k4, k5 = jax.random.split(key, 6)

    # Module config: DPLayerNorm(normalized_shape=32); reset_parameters() gives
    # weight = ones, bias = zeros.  (packed path: k=4, hp=128)
    x = jax.random.normal(k0, (2, 8, 32), dtype=jnp.float32)
    w = jnp.ones((32,), dtype=jnp.float32)
    b = jnp.zeros((32,), dtype=jnp.float32)
    y = jax.block_until_ready(dp_layer_norm_forward(x, w, b, eps))
    assert bool(jnp.allclose(y, ref_ln(x, w, b, eps), atol=1e-5, rtol=1e-4)), \
        "mismatch vs reference (packed path)"

    # Unpacked (H >= 128) path with a clipped partial block.
    x2 = jax.random.normal(k1, (3, 5, 128), dtype=jnp.float32)
    w2 = jax.random.normal(k2, (128,), dtype=jnp.float32)
    b2 = jax.random.normal(k3, (128,), dtype=jnp.float32)
    y2 = jax.block_until_ready(dp_layer_norm_forward(x2, w2, b2, eps))
    assert bool(jnp.allclose(y2, ref_ln(x2, w2, b2, eps), atol=1e-5, rtol=1e-4)), \
        "mismatch vs reference (unpacked path)"

    # Packed path with multiple grid steps and a ragged (clipped) final block.
    x3 = jax.random.normal(k4, (4, 100, 32), dtype=jnp.float32)
    y3 = jax.block_until_ready(dp_layer_norm_forward(x3, w, b, eps))
    assert bool(jnp.allclose(y3, ref_ln(x3, w, b, eps), atol=1e-5, rtol=1e-4)), \
        "mismatch vs reference (packed, ragged grid)"

    # Small-H fallback where rows are not divisible by the packing factor.
    x4 = jax.random.normal(k5, (3, 37, 64), dtype=jnp.float32)
    w4 = jnp.ones((64,), dtype=jnp.float32)
    b4 = jnp.zeros((64,), dtype=jnp.float32)
    y4 = jax.block_until_ready(dp_layer_norm_forward(x4, w4, b4, eps))
    assert bool(jnp.allclose(y4, ref_ln(x4, w4, b4, eps), atol=1e-5, rtol=1e-4)), \
        "mismatch vs reference (small-H fallback)"

    print("KERNEL_OK")
</pallas_src>

<mosaic_0001>
module attributes {stable_mosaic.version = 11 : i64} {
  func.func @_ln_kernel_packed(%arg0: i32, %arg1: memref<8x128xf32, #tpu.memory_space<vmem>>, %arg2: memref<2x128xf32, #tpu.memory_space<vmem>>, %arg3: memref<128x128xf32, #tpu.memory_space<vmem>>, %arg4: memref<8x128xf32, #tpu.memory_space<vmem>>) attributes {dimension_semantics = [#tpu.dimension_semantics<parallel>], iteration_bounds = array<i64: 1>, scalar_prefetch = 0 : i64, scratch_operands = 0 : i64, tpu.core_type = #tpu.core_type<tc>, window_params = [{transform_indices = @transform_0, window_bounds = array<i64: 8, 128>}, {pipeline_mode = #tpu.pipeline_mode<synchronous>, transform_indices = @transform_1, window_bounds = array<i64: 2, 128>}, {pipeline_mode = #tpu.pipeline_mode<synchronous>, transform_indices = @transform_2, window_bounds = array<i64: 128, 128>}, {transform_indices = @transform_3, window_bounds = array<i64: 8, 128>}]} {
    %c0 = arith.constant 0 : index
    %c0_0 = arith.constant 0 : index
    %0 = vector.load %arg1[%c0, %c0_0] : memref<8x128xf32, #tpu.memory_space<vmem>>, vector<8x128xf32>
    %c0_1 = arith.constant 0 : index
    %c0_2 = arith.constant 0 : index
    %1 = vector.load %arg2[%c0_1, %c0_2] : memref<2x128xf32, #tpu.memory_space<vmem>>, vector<1x128xf32>
    %c1 = arith.constant 1 : index
    %c0_3 = arith.constant 0 : index
    %2 = vector.load %arg2[%c1, %c0_3] : memref<2x128xf32, #tpu.memory_space<vmem>>, vector<1x128xf32>
    %c0_4 = arith.constant 0 : index
    %c0_5 = arith.constant 0 : index
    %3 = vector.load %arg3[%c0_4, %c0_5] : memref<128x128xf32, #tpu.memory_space<vmem>>, vector<128x128xf32>
    %cst = arith.constant dense<0.000000e+00> : vector<8x128xf32>
    %4 = tpu.matmul %0, %3, %cst {dimension_numbers = #tpu.dot_dimension_numbers<[1], [0], [0], [1], [0, 0, 1, 1], [], []>, precision = #tpu.contract_precision<fp32>} : vector<8x128xf32>, vector<128x128xf32>, vector<8x128xf32> -> vector<8x128xf32>
    %cst_6 = arith.constant 3.125000e-02 : f32
    %5 = vector.broadcast %cst_6 : f32 to vector<8x128xf32>
    %6 = arith.mulf %4, %5 : vector<8x128xf32>
    %7 = arith.subf %0, %6 : vector<8x128xf32>
    %8 = arith.mulf %7, %7 : vector<8x128xf32>
    %cst_7 = arith.constant dense<0.000000e+00> : vector<8x128xf32>
    %9 = tpu.matmul %8, %3, %cst_7 {dimension_numbers = #tpu.dot_dimension_numbers<[1], [0], [0], [1], [0, 0, 1, 1], [], []>, precision = #tpu.contract_precision<fp32>} : vector<8x128xf32>, vector<128x128xf32>, vector<8x128xf32> -> vector<8x128xf32>
    %cst_8 = arith.constant 3.125000e-02 : f32
    %10 = vector.broadcast %cst_8 : f32 to vector<8x128xf32>
    %11 = arith.mulf %9, %10 : vector<8x128xf32>
    %cst_9 = arith.constant 9.99999974E-6 : f32
    %12 = vector.broadcast %cst_9 : f32 to vector<8x128xf32>
    %13 = arith.addf %11, %12 : vector<8x128xf32>
    %14 = math.rsqrt %13 : vector<8x128xf32>
    %15 = arith.mulf %7, %14 : vector<8x128xf32>
    %16 = vector.broadcast %1 : vector<1x128xf32> to vector<8x128xf32>
    %17 = arith.mulf %15, %16 : vector<8x128xf32>
    %18 = vector.broadcast %2 : vector<1x128xf32> to vector<8x128xf32>
    %19 = arith.addf %17, %18 : vector<8x128xf32>
    %c0_10 = arith.constant 0 : index
    %c0_11 = arith.constant 0 : index
    %20 = vector.load %arg4[%c0_10, %c0_11] : memref<8x128xf32, #tpu.memory_space<vmem>>, vector<8x128xf32>
    tpu.vector_store %arg4[%c0_10, %c0_11], %19 {strides = array<i32>} : memref<8x128xf32, #tpu.memory_space<vmem>>, vector<8x128xf32>,
    return
  }
  func.func @transform_0(%arg0: i32) -> (i32, i32) {
    %c0_i32 = arith.constant 0 : i32
    %c0_i32_0 = arith.constant 0 : i32
    return %arg0, %c0_i32 : i32, i32
  }
  func.func @transform_1(%arg0: i32) -> (i32, i32) {
    %c0_i32 = arith.constant 0 : i32
    %c0_i32_0 = arith.constant 0 : i32
    %c0_i32_1 = arith.constant 0 : i32
    return %c0_i32, %c0_i32_0 : i32, i32
  }
  func.func @transform_2(%arg0: i32) -> (i32, i32) {
    %c0_i32 = arith.constant 0 : i32
    %c0_i32_0 = arith.constant 0 : i32
    %c0_i32_1 = arith.constant 0 : i32
    return %c0_i32, %c0_i32_0 : i32, i32
  }
  func.func @transform_3(%arg0: i32) -> (i32, i32) {
    %c0_i32 = arith.constant 0 : i32
    %c0_i32_0 = arith.constant 0 : i32
    return %arg0, %c0_i32 : i32, i32
  }
}

</mosaic_0001>

<llo_original>
// kernel: tpu_custom_call.1
$region0: #{tpu_custom_call.1}
  #allocation0 [shape = 'u32[]', space=smem, size = 0x4, offset = 0x4, fixed_abs, tag = 'smem constant byte address 0x4 - core index']
  #allocation1 [shape = 'u32[144,128]{1,0:T(1,128)}', space=vmem, size = 0x12000, scoped, tag = 'internal scratch']
  %s0 = inlined_call_operand.hbm [shape: f32[4,128], index: 0, kind: input, shape index: {}]
  %s1 = inlined_call_operand.vmem [shape: f32[2,128], index: 1, kind: input, shape index: {}]
  %s2 = inlined_call_operand.hbm [shape: f32[128,128], index: 2, kind: input, shape index: {}]
  %s3 = inlined_call_operand.hbm [shape: f32[4,128], index: 3, kind: output, shape index: {}]
  %s4 = sld [smem:[#allocation0]]
  $region30: #{tpu_custom_call.1} parent=0
    _
  %s6 = ssub.s32 1, %s4
  %s7 = scalar_select 0, %s6, %s4
  $region1: #{tpu_custom_call.1} parent=0
    #allocation2 [shape = 'u8[4096]{0}', space=vmem, size = 0x1000, scoped, tag = 'input window, operand 0, single buffered']
    #allocation3 [shape = 's32[1]{0}', space=sflag, size = 0x4, scoped, tag = 'scoped memory for tpu_custom_call.1']
    #allocation4 [shape = 's32[1]{0}', space=sflag, size = 0x4, scoped, tag = 'scoped memory for tpu_custom_call.1']
    #allocation5 [shape = 'u8[65536]{0}', space=vmem, size = 0x10000, scoped, tag = 'input window, operand 2, single buffered']
    #allocation6 [shape = 's32[1]{0}', space=sflag, size = 0x4, scoped, tag = 'scoped memory for tpu_custom_call.1']
    #allocation7 [shape = 'u8[4096]{0}', space=vmem, size = 0x1000, scoped, tag = 'output window, operand 0, single buffered']
    %8 = vsyncpa [#allocation3], 0
    %9 = vsyncpa [#allocation6], 0
    %10 = vsyncpa [#allocation4], 0
    // Predicated region
    $region2: #{tpu_custom_call.1} parent=1 // pred_check
      _
    $region3: #{tpu_custom_call.1} parent=1 // pred_check_branch
      %12 = sbr.rel (0) target = $region5
    $region4: #{tpu_custom_call.1} parent=1 // pred_region
      %s14 = ssub.s32 128, 64
      %15 = vsyncadd [#allocation3], %s14
      %s16 = sshll.u32 [#allocation2], 4
      %s17 = int_to_ptr.vmem [resolvable:$true] %s16
      %22 = dma.hbm_to_vmem [thread:$0]  %s0, 64, %s17, [#allocation3], 64, 64, 4
    $region5: #{tpu_custom_call.1} parent=1 // pred_fallthru
      _
    // Predicated region
    $region6: #{tpu_custom_call.1} parent=1 // pred_check
      _
    $region7: #{tpu_custom_call.1} parent=1 // pred_check_branch
      %24 = sbr.rel (0) target = $region9
    $region8: #{tpu_custom_call.1} parent=1 // pred_region
      _
    $region9: #{tpu_custom_call.1} parent=1 // pred_fallthru
      _
    // Predicated region
    $region10: #{tpu_custom_call.1} parent=1 // pred_check
      _
    $region11: #{tpu_custom_call.1} parent=1 // pred_check_branch
      %26 = sbr.rel (0) target = $region13
    $region12: #{tpu_custom_call.1} parent=1 // pred_region
      %s28 = ssub.s32 2048, 2048
      %29 = vsyncadd [#allocation6], %s28
      %s30 = sshll.u32 [#allocation5], 4
      %s31 = int_to_ptr.vmem [resolvable:$true] %s30
      %36 = dma.hbm_to_vmem [thread:$0]  %s2, 2048, %s31, [#allocation6], 128, 128, 8
    $region13: #{tpu_custom_call.1} parent=1 // pred_fallthru
      _
    // Predicated region
    $region14: #{tpu_custom_call.1} parent=1 // pred_check
      _
    $region15: #{tpu_custom_call.1} parent=1 // pred_check_branch
      %38 = sbr.rel (0) target = $region17
    $region16: #{tpu_custom_call.1} parent=1 // pred_region
      %39 = dma.done [#allocation3], 128
    $region17: #{tpu_custom_call.1} parent=1 // pred_fallthru
      _
    // Predicated region
    $region18: #{tpu_custom_call.1} parent=1 // pred_check
      _
    $region19: #{tpu_custom_call.1} parent=1 // pred_check_branch
      %41 = sbr.rel (0) target = $region21
    $region20: #{tpu_custom_call.1} parent=1 // pred_region
      %42 = dma.done [#allocation6], 2048
    $region21: #{tpu_custom_call.1} parent=1 // pred_fallthru
      _
    %v43 = vld [vmem:[#allocation2] sm:$0xff]
    %v44 = vld [vmem:[%s1] sm:$0x1]
    %v45 = vld [vmem:[%s1 + $0x1] sm:$0x1]
    %v46 = vld [vmem:[#allocation5] sm:$0xff]
    %v47 = vld [vmem:[#allocation5 + $0x8] sm:$0xff]
    %v48 = vld [vmem:[#allocation5 + $0x10] sm:$0xff]
    %v49 = vld [vmem:[#allocation5 + $0x18] sm:$0xff]
    %v50 = vld [vmem:[#allocation5 + $0x20] sm:$0xff]
    %v51 = vld [vmem:[#allocation5 + $0x28] sm:$0xff]
    %v52 = vld [vmem:[#allocation5 + $0x30] sm:$0xff]
    %v53 = vld [vmem:[#allocation5 + $0x38] sm:$0xff]
    %v54 = vld [vmem:[#allocation5 + $0x40] sm:$0xff]
    %v55 = vld [vmem:[#allocation5 + $0x48] sm:$0xff]
    %v56 = vld [vmem:[#allocation5 + $0x50] sm:$0xff]
    %v57 = vld [vmem:[#allocation5 + $0x58] sm:$0xff]
    %v58 = vld [vmem:[#allocation5 + $0x60] sm:$0xff]
    %v59 = vld [vmem:[#allocation5 + $0x68] sm:$0xff]
    %v60 = vld [vmem:[#allocation5 + $0x70] sm:$0xff]
    %v61 = vld [vmem:[#allocation5 + $0x78] sm:$0xff]
    %62 = vmatprep.subr.mxu0 0.0
    %v63 = vand.u32 %v46, 4294901760
    %64 = vmatpush1.msra.mxu0 %v63
    %65 = vmatprep.subr.mxu0 0.0
    %v66 = vand.u32 %v47, 4294901760
    %67 = vmatpush1.msra.mxu0 %v66
    %68 = vmatprep.subr.mxu0 0.0
    %v69 = vand.u32 %v48, 4294901760
    %70 = vmatpush1.msra.mxu0 %v69
    %71 = vmatprep.subr.mxu0 0.0
    %v72 = vand.u32 %v49, 4294901760
    %73 = vmatpush1.msra.mxu0 %v72
    %74 = vmatprep.subr.mxu0 0.0
    %v75 = vand.u32 %v50, 4294901760
    %76 = vmatpush1.msra.mxu0 %v75
    %77 = vmatprep.subr.mxu0 0.0
    %v78 = vand.u32 %v51, 4294901760
    %79 = vmatpush1.msra.mxu0 %v78
    %80 = vmatprep.subr.mxu0 0.0
    %v81 = vand.u32 %v52, 4294901760
    %82 = vmatpush1.msra.mxu0 %v81
    %83 = vmatprep.subr.mxu0 0.0
    %v84 = vand.u32 %v53, 4294901760
    %85 = vmatpush1.msra.mxu0 %v84
    %86 = vmatprep.subr.mxu0 0.0
    %v87 = vand.u32 %v54, 4294901760
    %88 = vmatpush1.msra.mxu0 %v87
    %89 = vmatprep.subr.mxu0 0.0
    %v90 = vand.u32 %v55, 4294901760
    %91 = vmatpush1.msra.mxu0 %v90
    %92 = vmatprep.subr.mxu0 0.0
    %v93 = vand.u32 %v56, 4294901760
    %94 = vmatpush1.msra.mxu0 %v93
    %95 = vmatprep.subr.mxu0 0.0
    %v96 = vand.u32 %v57, 4294901760
    %97 = vmatpush1.msra.mxu0 %v96
    %98 = vmatprep.subr.mxu0 0.0
    %v99 = vand.u32 %v58, 4294901760
    %100 = vmatpush1.msra.mxu0 %v99
    %101 = vmatprep.subr.mxu0 0.0
    %v102 = vand.u32 %v59, 4294901760
    %103 = vmatpush1.msra.mxu0 %v102
    %104 = vmatprep.subr.mxu0 0.0
    %v105 = vand.u32 %v60, 4294901760
    %106 = vmatpush1.msra.mxu0 %v105
    %107 = vmatprep.subr.mxu0 0.0
    %v108 = vand.u32 %v61, 4294901760
    %109 = vmatpush1.msra.mxu0 %v108
    %110 = vmatprep.subr.mxu0 0.0
    %111 = vmatpush1.msra.mxu0 0.0
    %112 = vmatprep.subr.mxu0 0.0
    %113 = vmatpush1.msra.mxu0 0.0
    %114 = vmatprep.subr.mxu0 0.0
    %115 = vmatpush1.msra.mxu0 0.0
    %116 = vmatprep.subr.mxu0 0.0
    %117 = vmatpush1.msra.mxu0 0.0
    %118 = vmatprep.subr.mxu0 0.0
    %119 = vmatpush1.msra.mxu0 0.0
    %120 = vmatprep.subr.mxu0 0.0
    %121 = vmatpush1.msra.mxu0 0.0
    %122 = vmatprep.subr.mxu0 0.0
    %123 = vmatpush1.msra.mxu0 0.0
    %124 = vmatprep.subr.mxu0 0.0
    %125 = vmatpush1.msra.mxu0 0.0
    %126 = vmatprep.subr.mxu0 0.0
    %127 = vmatpush1.msra.mxu0 0.0
    %128 = vmatprep.subr.mxu0 0.0
    %129 = vmatpush1.msra.mxu0 0.0
    %130 = vmatprep.subr.mxu0 0.0
    %131 = vmatpush1.msra.mxu0 0.0
    %132 = vmatprep.subr.mxu0 0.0
    %133 = vmatpush1.msra.mxu0 0.0
    %134 = vmatprep.subr.mxu0 0.0
    %135 = vmatpush1.msra.mxu0 0.0
    %136 = vmatprep.subr.mxu0 0.0
    %137 = vmatpush1.msra.mxu0 0.0
    %138 = vmatprep.subr.mxu0 0.0
    %139 = vmatpush1.msra.mxu0 0.0
    %140 = vmatprep.subr.mxu0 0.0
    %141 = vmatpush1.msra.mxu0 0.0
    %142 = vmatprep.mubr.f32.mxu0 0.0
    %v143 = vand.u32 %v43, 4294901760
    %v144 = vsub.f32 %v43, %v143
    %v145 = vand.u32 %v144, 4294901760
    %v146 = vsub.f32 %v144, %v145
    %v147 = vand.u32 %v146, 4294901760
    %148 = vmatmul.mubr.f32.gmra.mrb[0].mxu0 %v147
    %v149 = vpop.f32.mrb[0].mxu0
    %v150 = vadd.f32 0.0, %v149
    %v151 = vpop.f32.mrb[0].mxu0
    %152 = vdwg.mxu0
    %153 = vmatprep.subr.mxu0 0.0
    %v154 = vand.u32 %v46, 4294901760
    %v155 = vsub.f32 %v46, %v154
    %v156 = vand.u32 %v155, 4294901760
    %v157 = vsub.f32 %v155, %v156
    %v158 = vand.u32 %v157, 4294901760
    %159 = vmatpush1.msra.mxu0 %v158
    %160 = vmatprep.subr.mxu0 0.0
    %v161 = vand.u32 %v47, 4294901760
    %v162 = vsub.f32 %v47, %v161
    %v163 = vand.u32 %v162, 4294901760
    %v164 = vsub.f32 %v162, %v163
    %v165 = vand.u32 %v164, 4294901760
    %166 = vmatpush1.msra.mxu0 %v165
    %167 = vmatprep.subr.mxu0 0.0
    %v168 = vand.u32 %v48, 4294901760
    %v169 = vsub.f32 %v48, %v168
    %v170 = vand.u32 %v169, 4294901760
    %v171 = vsub.f32 %v169, %v170
    %v172 = vand.u32 %v171, 4294901760
    %173 = vmatpush1.msra.mxu0 %v172
    %174 = vmatprep.subr.mxu0 0.0
    %v175 = vand.u32 %v49, 4294901760
    %v176 = vsub.f32 %v49, %v175
    %v177 = vand.u32 %v176, 4294901760
    %v178 = vsub.f32 %v176, %v177
    %v179 = vand.u32 %v178, 4294901760
    %180 = vmatpush1.msra.mxu0 %v179
    %181 = vmatprep.subr.mxu0 0.0
    %v182 = vand.u32 %v50, 4294901760
    %v183 = vsub.f32 %v50, %v182
    %v184 = vand.u32 %v183, 4294901760
    %v185 = vsub.f32 %v183, %v184
    %v186 = vand.u32 %v185, 4294901760
    %187 = vmatpush1.msra.mxu0 %v186
    %188 = vmatprep.subr.mxu0 0.0
    %v189 = vand.u32 %v51, 4294901760
    %v190 = vsub.f32 %v51, %v189
    %v191 = vand.u32 %v190, 4294901760
    %v192 = vsub.f32 %v190, %v191
    %v193 = vand.u32 %v192, 4294901760
    %194 = vmatpush1.msra.mxu0 %v193
    %195 = vmatprep.subr.mxu0 0.0
    %v196 = vand.u32 %v52, 4294901760
    %v197 = vsub.f32 %v52, %v196
    %v198 = vand.u32 %v197, 4294901760
    %v199 = vsub.f32 %v197, %v198
    %v200 = vand.u32 %v199, 4294901760
    %201 = vmatpush1.msra.mxu0 %v200
    %202 = vmatprep.subr.mxu0 0.0
    %v203 = vand.u32 %v53, 4294901760
    %v204 = vsub.f32 %v53, %v203
    %v205 = vand.u32 %v204, 4294901760
    %v206 = vsub.f32 %v204, %v205
    %v207 = vand.u32 %v206, 4294901760
    %208 = vmatpush1.msra.mxu0 %v207
    %209 = vmatprep.subr.mxu0 0.0
    %v210 = vand.u32 %v54, 4294901760
    %v211 = vsub.f32 %v54, %v210
    %v212 = vand.u32 %v211, 4294901760
    %v213 = vsub.f32 %v211, %v212
    %v214 = vand.u32 %v213, 4294901760
    %215 = vmatpush1.msra.mxu0 %v214
    %216 = vmatprep.subr.mxu0 0.0
    %v217 = vand.u32 %v55, 4294901760
    %v218 = vsub.f32 %v55, %v217
    %v219 = vand.u32 %v218, 4294901760
    %v220 = vsub.f32 %v218, %v219
    %v221 = vand.u32 %v220, 4294901760
    %222 = vmatpush1.msra.mxu0 %v221
    %223 = vmatprep.subr.mxu0 0.0
    %v224 = vand.u32 %v56, 4294901760
    %v225 = vsub.f32 %v56, %v224
    %v226 = vand.u32 %v225, 4294901760
    %v227 = vsub.f32 %v225, %v226
    %v228 = vand.u32 %v227, 4294901760
    %229 = vmatpush1.msra.mxu0 %v228
    %230 = vmatprep.subr.mxu0 0.0
    %v231 = vand.u32 %v57, 4294901760
    %v232 = vsub.f32 %v57, %v231
    %v233 = vand.u32 %v232, 4294901760
    %v234 = vsub.f32 %v232, %v233
    %v235 = vand.u32 %v234, 4294901760
    %236 = vmatpush1.msra.mxu0 %v235
    %237 = vmatprep.subr.mxu0 0.0
    %v238 = vand.u32 %v58, 4294901760
    %v239 = vsub.f32 %v58, %v238
    %v240 = vand.u32 %v239, 4294901760
    %v241 = vsub.f32 %v239, %v240
    %v242 = vand.u32 %v241, 4294901760
    %243 = vmatpush1.msra.mxu0 %v242
    %244 = vmatprep.subr.mxu0 0.0
    %v245 = vand.u32 %v59, 4294901760
    %v246 = vsub.f32 %v59, %v245
    %v247 = vand.u32 %v246, 4294901760
    %v248 = vsub.f32 %v246, %v247
    %v249 = vand.u32 %v248, 4294901760
    %250 = vmatpush1.msra.mxu0 %v249
    %251 = vmatprep.subr.mxu0 0.0
    %v252 = vand.u32 %v60, 4294901760
    %v253 = vsub.f32 %v60, %v252
    %v254 = vand.u32 %v253, 4294901760
    %v255 = vsub.f32 %v253, %v254
    %v256 = vand.u32 %v255, 4294901760
    %257 = vmatpush1.msra.mxu0 %v256
    %258 = vmatprep.subr.mxu0 0.0
    %v259 = vand.u32 %v61, 4294901760
    %v260 = vsub.f32 %v61, %v259
    %v261 = vand.u32 %v260, 4294901760
    %v262 = vsub.f32 %v260, %v261
    %v263 = vand.u32 %v262, 4294901760
    %264 = vmatpush1.msra.mxu0 %v263
    %265 = vmatprep.subr.mxu0 0.0
    %266 = vmatpush1.msra.mxu0 0.0
    %267 = vmatprep.subr.mxu0 0.0
    %268 = vmatpush1.msra.mxu0 0.0
    %269 = vmatprep.subr.mxu0 0.0
    %270 = vmatpush1.msra.mxu0 0.0
    %271 = vmatprep.subr.mxu0 0.0
    %272 = vmatpush1.msra.mxu0 0.0
    %273 = vmatprep.subr.mxu0 0.0
    %274 = vmatpush1.msra.mxu0 0.0
    %275 = vmatprep.subr.mxu0 0.0
    %276 = vmatpush1.msra.mxu0 0.0
    %277 = vmatprep.subr.mxu0 0.0
    %278 = vmatpush1.msra.mxu0 0.0
    %279 = vmatprep.subr.mxu0 0.0
    %280 = vmatpush1.msra.mxu0 0.0
    %281 = vmatprep.subr.mxu0 0.0
    %282 = vmatpush1.msra.mxu0 0.0
    %283 = vmatprep.subr.mxu0 0.0
    %284 = vmatpush1.msra.mxu0 0.0
    %285 = vmatprep.subr.mxu0 0.0
    %286 = vmatpush1.msra.mxu0 0.0
    %287 = vmatprep.subr.mxu0 0.0
    %288 = vmatpush1.msra.mxu0 0.0
    %289 = vmatprep.subr.mxu0 0.0
    %290 = vmatpush1.msra.mxu0 0.0
    %291 = vmatprep.subr.mxu0 0.0
    %292 = vmatpush1.msra.mxu0 0.0
    %293 = vmatprep.subr.mxu0 0.0
    %294 = vmatpush1.msra.mxu0 0.0
    %295 = vmatprep.subr.mxu0 0.0
    %296 = vmatpush1.msra.mxu0 0.0
    %297 = vmatprep.mubr.f32.mxu0 0.0
    %v298 = vand.u32 %v43, 4294901760
    %299 = vmatmul.mubr.f32.gmra.mrb[0].mxu0 %v298
    %v300 = vpop.f32.mrb[0].mxu0
    %v301 = vadd.f32 %v150, %v300
    %v302 = vpop.f32.mrb[0].mxu0
    %303 = vdwg.mxu0
    %304 = vmatprep.subr.mxu0 0.0
    %v305 = vand.u32 %v46, 4294901760
    %v306 = vsub.f32 %v46, %v305
    %307 = vmatpush1.msra.mxu0 %v306
    %308 = vmatprep.subr.mxu0 0.0
    %v309 = vand.u32 %v47, 4294901760
    %v310 = vsub.f32 %v47, %v309
    %311 = vmatpush1.msra.mxu0 %v310
    %312 = vmatprep.subr.mxu0 0.0
    %v313 = vand.u32 %v48, 4294901760
    %v314 = vsub.f32 %v48, %v313
    %315 = vmatpush1.msra.mxu0 %v314
    %316 = vmatprep.subr.mxu0 0.0
    %v317 = vand.u32 %v49, 4294901760
    %v318 = vsub.f32 %v49, %v317
    %319 = vmatpush1.msra.mxu0 %v318
    %320 = vmatprep.subr.mxu0 0.0
    %v321 = vand.u32 %v50, 4294901760
    %v322 = vsub.f32 %v50, %v321
    %323 = vmatpush1.msra.mxu0 %v322
    %324 = vmatprep.subr.mxu0 0.0
    %v325 = vand.u32 %v51, 4294901760
    %v326 = vsub.f32 %v51, %v325
    %327 = vmatpush1.msra.mxu0 %v326
    %328 = vmatprep.subr.mxu0 0.0
    %v329 = vand.u32 %v52, 4294901760
    %v330 = vsub.f32 %v52, %v329
    %331 = vmatpush1.msra.mxu0 %v330
    %332 = vmatprep.subr.mxu0 0.0
    %v333 = vand.u32 %v53, 4294901760
    %v334 = vsub.f32 %v53, %v333
    %335 = vmatpush1.msra.mxu0 %v334
    %336 = vmatprep.subr.mxu0 0.0
    %v337 = vand.u32 %v54, 4294901760
    %v338 = vsub.f32 %v54, %v337
    %339 = vmatpush1.msra.mxu0 %v338
    %340 = vmatprep.subr.mxu0 0.0
    %v341 = vand.u32 %v55, 4294901760
    %v342 = vsub.f32 %v55, %v341
    %343 = vmatpush1.msra.mxu0 %v342
    %344 = vmatprep.subr.mxu0 0.0
    %v345 = vand.u32 %v56, 4294901760
    %v346 = vsub.f32 %v56, %v345
    %347 = vmatpush1.msra.mxu0 %v346
    %348 = vmatprep.subr.mxu0 0.0
    %v349 = vand.u32 %v57, 4294901760
    %v350 = vsub.f32 %v57, %v349
    %351 = vmatpush1.msra.mxu0 %v350
    %352 = vmatprep.subr.mxu0 0.0
    %v353 = vand.u32 %v58, 4294901760
    %v354 = vsub.f32 %v58, %v353
    %355 = vmatpush1.msra.mxu0 %v354
    %356 = vmatprep.subr.mxu0 0.0
    %v357 = vand.u32 %v59, 4294901760
    %v358 = vsub.f32 %v59, %v357
    %359 = vmatpush1.msra.mxu0 %v358
    %360 = vmatprep.subr.mxu0 0.0
    %v361 = vand.u32 %v60, 4294901760
    %v362 = vsub.f32 %v60, %v361
    %363 = vmatpush1.msra.mxu0 %v362
    %364 = vmatprep.subr.mxu0 0.0
    %v365 = vand.u32 %v61, 4294901760
    %v366 = vsub.f32 %v61, %v365
    %367 = vmatpush1.msra.mxu0 %v366
    %368 = vmatprep.subr.mxu0 0.0
    %369 = vmatpush1.msra.mxu0 0.0
    %370 = vmatprep.subr.mxu0 0.0
    %371 = vmatpush1.msra.mxu0 0.0
    %372 = vmatprep.subr.mxu0 0.0
    %373 = vmatpush1.msra.mxu0 0.0
    %374 = vmatprep.subr.mxu0 0.0
    %375 = vmatpush1.msra.mxu0 0.0
    %376 = vmatprep.subr.mxu0 0.0
    %377 = vmatpush1.msra.mxu0 0.0
    %378 = vmatprep.subr.mxu0 0.0
    %379 = vmatpush1.msra.mxu0 0.0
    %380 = vmatprep.subr.mxu0 0.0
    %381 = vmatpush1.msra.mxu0 0.0
    %382 = vmatprep.subr.mxu0 0.0
    %383 = vmatpush1.msra.mxu0 0.0
    %384 = vmatprep.subr.mxu0 0.0
    %385 = vmatpush1.msra.mxu0 0.0
    %386 = vmatprep.subr.mxu0 0.0
    %387 = vmatpush1.msra.mxu0 0.0
    %388 = vmatprep.subr.mxu0 0.0
    %389 = vmatpush1.msra.mxu0 0.0
    %390 = vmatprep.subr.mxu0 0.0
    %391 = vmatpush1.msra.mxu0 0.0
    %392 = vmatprep.subr.mxu0 0.0
    %393 = vmatpush1.msra.mxu0 0.0
    %394 = vmatprep.subr.mxu0 0.0
    %395 = vmatpush1.msra.mxu0 0.0
    %396 = vmatprep.subr.mxu0 0.0
    %397 = vmatpush1.msra.mxu0 0.0
    %398 = vmatprep.subr.mxu0 0.0
    %399 = vmatpush1.msra.mxu0 0.0
    %400 = vmatprep.mubr.f32.mxu0 0.0
    %v401 = vand.u32 %v43, 4294901760
    %v402 = vsub.f32 %v43, %v401
    %403 = vmatmul.mubr.f32.gmra.mrb[0].mxu0 %v402
    %v404 = vpop.f32.mrb[0].mxu0
    %v405 = vadd.f32 %v301, %v404
    %v406 = vpop.f32.mrb[0].mxu0
    %407 = vdwg.mxu0
    %408 = vmatprep.subr.mxu0 0.0
    %v409 = vand.u32 %v46, 4294901760
    %410 = vmatpush1.msra.mxu0 %v409
    %411 = vmatprep.subr.mxu0 0.0
    %v412 = vand.u32 %v47, 4294901760
    %413 = vmatpush1.msra.mxu0 %v412
    %414 = vmatprep.subr.mxu0 0.0
    %v415 = vand.u32 %v48, 4294901760
    %416 = vmatpush1.msra.mxu0 %v415
    %417 = vmatprep.subr.mxu0 0.0
    %v418 = vand.u32 %v49, 4294901760
    %419 = vmatpush1.msra.mxu0 %v418
    %420 = vmatprep.subr.mxu0 0.0
    %v421 = vand.u32 %v50, 4294901760
    %422 = vmatpush1.msra.mxu0 %v421
    %423 = vmatprep.subr.mxu0 0.0
    %v424 = vand.u32 %v51, 4294901760
    %425 = vmatpush1.msra.mxu0 %v424
    %426 = vmatprep.subr.mxu0 0.0
    %v427 = vand.u32 %v52, 4294901760
    %428 = vmatpush1.msra.mxu0 %v427
    %429 = vmatprep.subr.mxu0 0.0
    %v430 = vand.u32 %v53, 4294901760
    %431 = vmatpush1.msra.mxu0 %v430
    %432 = vmatprep.subr.mxu0 0.0
    %v433 = vand.u32 %v54, 4294901760
    %434 = vmatpush1.msra.mxu0 %v433
    %435 = vmatprep.subr.mxu0 0.0
    %v436 = vand.u32 %v55, 4294901760
    %437 = vmatpush1.msra.mxu0 %v436
    %438 = vmatprep.subr.mxu0 0.0
    %v439 = vand.u32 %v56, 4294901760
    %440 = vmatpush1.msra.mxu0 %v439
    %441 = vmatprep.subr.mxu0 0.0
    %v442 = vand.u32 %v57, 4294901760
    %443 = vmatpush1.msra.mxu0 %v442
    %444 = vmatprep.subr.mxu0 0.0
    %v445 = vand.u32 %v58, 4294901760
    %446 = vmatpush1.msra.mxu0 %v445
    %447 = vmatprep.subr.mxu0 0.0
    %v448 = vand.u32 %v59, 4294901760
    %449 = vmatpush1.msra.mxu0 %v448
    %450 = vmatprep.subr.mxu0 0.0
    %v451 = vand.u32 %v60, 4294901760
    %452 = vmatpush1.msra.mxu0 %v451
    %453 = vmatprep.subr.mxu0 0.0
    %v454 = vand.u32 %v61, 4294901760
    %455 = vmatpush1.msra.mxu0 %v454
    %456 = vmatprep.subr.mxu0 0.0
    %457 = vmatpush1.msra.mxu0 0.0
    %458 = vmatprep.subr.mxu0 0.0
    %459 = vmatpush1.msra.mxu0 0.0
    %460 = vmatprep.subr.mxu0 0.0
    %461 = vmatpush1.msra.mxu0 0.0
    %462 = vmatprep.subr.mxu0 0.0
    %463 = vmatpush1.msra.mxu0 0.0
    %464 = vmatprep.subr.mxu0 0.0
    %465 = vmatpush1.msra.mxu0 0.0
    %466 = vmatprep.subr.mxu0 0.0
    %467 = vmatpush1.msra.mxu0 0.0
    %468 = vmatprep.subr.mxu0 0.0
    %469 = vmatpush1.msra.mxu0 0.0
    %470 = vmatprep.subr.mxu0 0.0
    %471 = vmatpush1.msra.mxu0 0.0
    %472 = vmatprep.subr.mxu0 0.0
    %473 = vmatpush1.msra.mxu0 0.0
    %474 = vmatprep.subr.mxu0 0.0
    %475 = vmatpush1.msra.mxu0 0.0
    %476 = vmatprep.subr.mxu0 0.0
    %477 = vmatpush1.msra.mxu0 0.0
    %478 = vmatprep.subr.mxu0 0.0
    %479 = vmatpush1.msra.mxu0 0.0
    %480 = vmatprep.subr.mxu0 0.0
    %481 = vmatpush1.msra.mxu0 0.0
    %482 = vmatprep.subr.mxu0 0.0
    %483 = vmatpush1.msra.mxu0 0.0
    %484 = vmatprep.subr.mxu0 0.0
    %485 = vmatpush1.msra.mxu0 0.0
    %486 = vmatprep.subr.mxu0 0.0
    %487 = vmatpush1.msra.mxu0 0.0
    %488 = vmatprep.mubr.f32.mxu0 0.0
    %v489 = vand.u32 %v43, 4294901760
    %v490 = vsub.f32 %v43, %v489
    %v491 = vand.u32 %v490, 4294901760
    %492 = vmatmul.mubr.f32.gmra.mrb[0].mxu0 %v491
    %v493 = vpop.f32.mrb[0].mxu0
    %v494 = vadd.f32 %v405, %v493
    %v495 = vpop.f32.mrb[0].mxu0
    %496 = vdwg.mxu0
    %497 = vmatprep.subr.mxu0 0.0
    %v498 = vand.u32 %v46, 4294901760
    %v499 = vsub.f32 %v46, %v498
    %v500 = vand.u32 %v499, 4294901760
    %501 = vmatpush1.msra.mxu0 %v500
    %502 = vmatprep.subr.mxu0 0.0
    %v503 = vand.u32 %v47, 4294901760
    %v504 = vsub.f32 %v47, %v503
    %v505 = vand.u32 %v504, 4294901760
    %506 = vmatpush1.msra.mxu0 %v505
    %507 = vmatprep.subr.mxu0 0.0
    %v508 = vand.u32 %v48, 4294901760
    %v509 = vsub.f32 %v48, %v508
    %v510 = vand.u32 %v509, 4294901760
    %511 = vmatpush1.msra.mxu0 %v510
    %512 = vmatprep.subr.mxu0 0.0
    %v513 = vand.u32 %v49, 4294901760
    %v514 = vsub.f32 %v49, %v513
    %v515 = vand.u32 %v514, 4294901760
    %516 = vmatpush1.msra.mxu0 %v515
    %517 = vmatprep.subr.mxu0 0.0
    %v518 = vand.u32 %v50, 4294901760
    %v519 = vsub.f32 %v50, %v518
    %v520 = vand.u32 %v519, 4294901760
    %521 = vmatpush1.msra.mxu0 %v520
    %522 = vmatprep.subr.mxu0 0.0
    %v523 = vand.u32 %v51, 4294901760
    %v524 = vsub.f32 %v51, %v523
    %v525 = vand.u32 %v524, 4294901760
    %526 = vmatpush1.msra.mxu0 %v525
    %527 = vmatprep.subr.mxu0 0.0
    %v528 = vand.u32 %v52, 4294901760
    %v529 = vsub.f32 %v52, %v528
    %v530 = vand.u32 %v529, 4294901760
    %531 = vmatpush1.msra.mxu0 %v530
    %532 = vmatprep.subr.mxu0 0.0
    %v533 = vand.u32 %v53, 4294901760
    %v534 = vsub.f32 %v53, %v533
    %v535 = vand.u32 %v534, 4294901760
    %536 = vmatpush1.msra.mxu0 %v535
    %537 = vmatprep.subr.mxu0 0.0
    %v538 = vand.u32 %v54, 4294901760
    %v539 = vsub.f32 %v54, %v538
    %v540 = vand.u32 %v539, 4294901760
    %541 = vmatpush1.msra.mxu0 %v540
    %542 = vmatprep.subr.mxu0 0.0
    %v543 = vand.u32 %v55, 4294901760
    %v544 = vsub.f32 %v55, %v543
    %v545 = vand.u32 %v544, 4294901760
    %546 = vmatpush1.msra.mxu0 %v545
    %547 = vmatprep.subr.mxu0 0.0
    %v548 = vand.u32 %v56, 4294901760
    %v549 = vsub.f32 %v56, %v548
    %v550 = vand.u32 %v549, 4294901760
    %551 = vmatpush1.msra.mxu0 %v550
    %552 = vmatprep.subr.mxu0 0.0
    %v553 = vand.u32 %v57, 4294901760
    %v554 = vsub.f32 %v57, %v553
    %v555 = vand.u32 %v554, 4294901760
    %556 = vmatpush1.msra.mxu0 %v555
    %557 = vmatprep.subr.mxu0 0.0
    %v558 = vand.u32 %v58, 4294901760
    %v559 = vsub.f32 %v58, %v558
    %v560 = vand.u32 %v559, 4294901760
    %561 = vmatpush1.msra.mxu0 %v560
    %562 = vmatprep.subr.mxu0 0.0
    %v563 = vand.u32 %v59, 4294901760
    %v564 = vsub.f32 %v59, %v563
    %v565 = vand.u32 %v564, 4294901760
    %566 = vmatpush1.msra.mxu0 %v565
    %567 = vmatprep.subr.mxu0 0.0
    %v568 = vand.u32 %v60, 4294901760
    %v569 = vsub.f32 %v60, %v568
    %v570 = vand.u32 %v569, 4294901760
    %571 = vmatpush1.msra.mxu0 %v570
    %572 = vmatprep.subr.mxu0 0.0
    %v573 = vand.u32 %v61, 4294901760
    %v574 = vsub.f32 %v61, %v573
    %v575 = vand.u32 %v574, 4294901760
    %576 = vmatpush1.msra.mxu0 %v575
    %577 = vmatprep.subr.mxu0 0.0
    %578 = vmatpush1.msra.mxu0 0.0
    %579 = vmatprep.subr.mxu0 0.0
    %580 = vmatpush1.msra.mxu0 0.0
    %581 = vmatprep.subr.mxu0 0.0
    %582 = vmatpush1.msra.mxu0 0.0
    %583 = vmatprep.subr.mxu0 0.0
    %584 = vmatpush1.msra.mxu0 0.0
    %585 = vmatprep.subr.mxu0 0.0
    %586 = vmatpush1.msra.mxu0 0.0
    %587 = vmatprep.subr.mxu0 0.0
    %588 = vmatpush1.msra.mxu0 0.0
    %589 = vmatprep.subr.mxu0 0.0
    %590 = vmatpush1.msra.mxu0 0.0
    %591 = vmatprep.subr.mxu0 0.0
    %592 = vmatpush1.msra.mxu0 0.0
    %593 = vmatprep.subr.mxu0 0.0
    %594 = vmatpush1.msra.mxu0 0.0
    %595 = vmatprep.subr.mxu0 0.0
    %596 = vmatpush1.msra.mxu0 0.0
    %597 = vmatprep.subr.mxu0 0.0
    %598 = vmatpush1.msra.mxu0 0.0
    %599 = vmatprep.subr.mxu0 0.0
    %600 = vmatpush1.msra.mxu0 0.0
    %601 = vmatprep.subr.mxu0 0.0
    %602 = vmatpush1.msra.mxu0 0.0
    %603 = vmatprep.subr.mxu0 0.0
    %604 = vmatpush1.msra.mxu0 0.0
    %605 = vmatprep.subr.mxu0 0.0
    %606 = vmatpush1.msra.mxu0 0.0
    %607 = vmatprep.subr.mxu0 0.0
    %608 = vmatpush1.msra.mxu0 0.0
    %609 = vmatprep.mubr.f32.mxu0 0.0
    %v610 = vand.u32 %v43, 4294901760
    %611 = vmatmul.mubr.f32.gmra.mrb[0].mxu0 %v610
    %v612 = vpop.f32.mrb[0].mxu0
    %v613 = vadd.f32 %v494, %v612
    %v614 = vpop.f32.mrb[0].mxu0
    %615 = vdwg.mxu0
    %616 = vmatprep.subr.mxu0 0.0
    %v617 = vand.u32 %v46, 4294901760
    %618 = vmatpush1.msra.mxu0 %v617
    %619 = vmatprep.subr.mxu0 0.0
    %v620 = vand.u32 %v47, 4294901760
    %621 = vmatpush1.msra.mxu0 %v620
    %622 = vmatprep.subr.mxu0 0.0
    %v623 = vand.u32 %v48, 4294901760
    %624 = vmatpush1.msra.mxu0 %v623
    %625 = vmatprep.subr.mxu0 0.0
    %v626 = vand.u32 %v49, 4294901760
    %627 = vmatpush1.msra.mxu0 %v626
    %628 = vmatprep.subr.mxu0 0.0
    %v629 = vand.u32 %v50, 4294901760
    %630 = vmatpush1.msra.mxu0 %v629
    %631 = vmatprep.subr.mxu0 0.0
    %v632 = vand.u32 %v51, 4294901760
    %633 = vmatpush1.msra.mxu0 %v632
    %634 = vmatprep.subr.mxu0 0.0
    %v635 = vand.u32 %v52, 4294901760
    %636 = vmatpush1.msra.mxu0 %v635
    %637 = vmatprep.subr.mxu0 0.0
    %v638 = vand.u32 %v53, 4294901760
    %639 = vmatpush1.msra.mxu0 %v638
    %640 = vmatprep.subr.mxu0 0.0
    %v641 = vand.u32 %v54, 4294901760
    %642 = vmatpush1.msra.mxu0 %v641
    %643 = vmatprep.subr.mxu0 0.0
    %v644 = vand.u32 %v55, 4294901760
    %645 = vmatpush1.msra.mxu0 %v644
    %646 = vmatprep.subr.mxu0 0.0
    %v647 = vand.u32 %v56, 4294901760
    %648 = vmatpush1.msra.mxu0 %v647
    %649 = vmatprep.subr.mxu0 0.0
    %v650 = vand.u32 %v57, 4294901760
    %651 = vmatpush1.msra.mxu0 %v650
    %652 = vmatprep.subr.mxu0 0.0
    %v653 = vand.u32 %v58, 4294901760
    %654 = vmatpush1.msra.mxu0 %v653
    %655 = vmatprep.subr.mxu0 0.0
    %v656 = vand.u32 %v59, 4294901760
    %657 = vmatpush1.msra.mxu0 %v656
    %658 = vmatprep.subr.mxu0 0.0
    %v659 = vand.u32 %v60, 4294901760
    %660 = vmatpush1.msra.mxu0 %v659
    %661 = vmatprep.subr.mxu0 0.0
    %v662 = vand.u32 %v61, 4294901760
    %663 = vmatpush1.msra.mxu0 %v662
    %664 = vmatprep.subr.mxu0 0.0
    %665 = vmatpush1.msra.mxu0 0.0
    %666 = vmatprep.subr.mxu0 0.0
    %667 = vmatpush1.msra.mxu0 0.0
    %668 = vmatprep.subr.mxu0 0.0
    %669 = vmatpush1.msra.mxu0 0.0
    %670 = vmatprep.subr.mxu0 0.0
    %671 = vmatpush1.msra.mxu0 0.0
    %672 = vmatprep.subr.mxu0 0.0
    %673 = vmatpush1.msra.mxu0 0.0
    %674 = vmatprep.subr.mxu0 0.0
    %675 = vmatpush1.msra.mxu0 0.0
    %676 = vmatprep.subr.mxu0 0.0
    %677 = vmatpush1.msra.mxu0 0.0
    %678 = vmatprep.subr.mxu0 0.0
    %679 = vmatpush1.msra.mxu0 0.0
    %680 = vmatprep.subr.mxu0 0.0
    %681 = vmatpush1.msra.mxu0 0.0
    %682 = vmatprep.subr.mxu0 0.0
    %683 = vmatpush1.msra.mxu0 0.0
    %684 = vmatprep.subr.mxu0 0.0
    %685 = vmatpush1.msra.mxu0 0.0
    %686 = vmatprep.subr.mxu0 0.0
    %687 = vmatpush1.msra.mxu0 0.0
    %688 = vmatprep.subr.mxu0 0.0
    %689 = vmatpush1.msra.mxu0 0.0
    %690 = vmatprep.subr.mxu0 0.0
    %691 = vmatpush1.msra.mxu0 0.0
    %692 = vmatprep.subr.mxu0 0.0
    %693 = vmatpush1.msra.mxu0 0.0
    %694 = vmatprep.subr.mxu0 0.0
    %695 = vmatpush1.msra.mxu0 0.0
    %696 = vmatprep.mubr.f32.mxu0 0.0
    %v697 = vand.u32 %v43, 4294901760
    %698 = vmatmul.mubr.f32.gmra.mrb[0].mxu0 %v697
    %v699 = vpop.f32.mrb[0].mxu0
    %v700 = vadd.f32 %v613, %v699
    %v701 = vpop.f32.mrb[0].mxu0
    %702 = vdwg.mxu0
    %v703 = vmul.f32 %v700, 0.03125
    %v704 = vsub.f32 %v43, %v703
    %v705 = vmul.f32 %v704, %v704
    %706 = vmatprep.subr.mxu0 0.0
    %v707 = vand.u32 %v46, 4294901760
    %708 = vmatpush1.msra.mxu0 %v707
    %709 = vmatprep.subr.mxu0 0.0
    %v710 = vand.u32 %v47, 4294901760
    %711 = vmatpush1.msra.mxu0 %v710
    %712 = vmatprep.subr.mxu0 0.0
    %v713 = vand.u32 %v48, 4294901760
    %714 = vmatpush1.msra.mxu0 %v713
    %715 = vmatprep.subr.mxu0 0.0
    %v716 = vand.u32 %v49, 4294901760
    %717 = vmatpush1.msra.mxu0 %v716
    %718 = vmatprep.subr.mxu0 0.0
    %v719 = vand.u32 %v50, 4294901760
    %720 = vmatpush1.msra.mxu0 %v719
    %721 = vmatprep.subr.mxu0 0.0
    %v722 = vand.u32 %v51, 4294901760
    %723 = vmatpush1.msra.mxu0 %v722
    %724 = vmatprep.subr.mxu0 0.0
    %v725 = vand.u32 %v52, 4294901760
    %726 = vmatpush1.msra.mxu0 %v725
    %727 = vmatprep.subr.mxu0 0.0
    %v728 = vand.u32 %v53, 4294901760
    %729 = vmatpush1.msra.mxu0 %v728
    %730 = vmatprep.subr.mxu0 0.0
    %v731 = vand.u32 %v54, 4294901760
    %732 = vmatpush1.msra.mxu0 %v731
    %733 = vmatprep.subr.mxu0 0.0
    %v734 = vand.u32 %v55, 4294901760
    %735 = vmatpush1.msra.mxu0 %v734
    %736 = vmatprep.subr.mxu0 0.0
    %v737 = vand.u32 %v56, 4294901760
    %738 = vmatpush1.msra.mxu0 %v737
    %739 = vmatprep.subr.mxu0 0.0
    %v740 = vand.u32 %v57, 4294901760
    %741 = vmatpush1.msra.mxu0 %v740
    %742 = vmatprep.subr.mxu0 0.0
    %v743 = vand.u32 %v58, 4294901760
    %744 = vmatpush1.msra.mxu0 %v743
    %745 = vmatprep.subr.mxu0 0.0
    %v746 = vand.u32 %v59, 4294901760
    %747 = vmatpush1.msra.mxu0 %v746
    %748 = vmatprep.subr.mxu0 0.0
    %v749 = vand.u32 %v60, 4294901760
    %750 = vmatpush1.msra.mxu0 %v749
    %751 = vmatprep.subr.mxu0 0.0
    %v752 = vand.u32 %v61, 4294901760
    %753 = vmatpush1.msra.mxu0 %v752
    %754 = vmatprep.subr.mxu0 0.0
    %755 = vmatpush1.msra.mxu0 0.0
    %756 = vmatprep.subr.mxu0 0.0
    %757 = vmatpush1.msra.mxu0 0.0
    %758 = vmatprep.subr.mxu0 0.0
    %759 = vmatpush1.msra.mxu0 0.0
    %760 = vmatprep.subr.mxu0 0.0
    %761 = vmatpush1.msra.mxu0 0.0
    %762 = vmatprep.subr.mxu0 0.0
    %763 = vmatpush1.msra.mxu0 0.0
    %764 = vmatprep.subr.mxu0 0.0
    %765 = vmatpush1.msra.mxu0 0.0
    %766 = vmatprep.subr.mxu0 0.0
    %767 = vmatpush1.msra.mxu0 0.0
    %768 = vmatprep.subr.mxu0 0.0
    %769 = vmatpush1.msra.mxu0 0.0
    %770 = vmatprep.subr.mxu0 0.0
    %771 = vmatpush1.msra.mxu0 0.0
    %772 = vmatprep.subr.mxu0 0.0
    %773 = vmatpush1.msra.mxu0 0.0
    %774 = vmatprep.subr.mxu0 0.0
    %775 = vmatpush1.msra.mxu0 0.0
    %776 = vmatprep.subr.mxu0 0.0
    %777 = vmatpush1.msra.mxu0 0.0
    %778 = vmatprep.subr.mxu0 0.0
    %779 = vmatpush1.msra.mxu0 0.0
    %780 = vmatprep.subr.mxu0 0.0
    %781 = vmatpush1.msra.mxu0 0.0
    %782 = vmatprep.subr.mxu0 0.0
    %783 = vmatpush1.msra.mxu0 0.0
    %784 = vmatprep.subr.mxu0 0.0
    %785 = vmatpush1.msra.mxu0 0.0
    %786 = vmatprep.mubr.f32.mxu0 0.0
    %v787 = vand.u32 %v705, 4294901760
    %v788 = vsub.f32 %v705, %v787
    %v789 = vand.u32 %v788, 4294901760
    %v790 = vsub.f32 %v788, %v789
    %v791 = vand.u32 %v790, 4294901760
    %792 = vmatmul.mubr.f32.gmra.mrb[0].mxu0 %v791
    %v793 = vpop.f32.mrb[0].mxu0
    %v794 = vadd.f32 0.0, %v793
    %v795 = vpop.f32.mrb[0].mxu0
    %796 = vdwg.mxu0
    %797 = vmatprep.subr.mxu0 0.0
    %v798 = vand.u32 %v46, 4294901760
    %v799 = vsub.f32 %v46, %v798
    %v800 = vand.u32 %v799, 4294901760
    %v801 = vsub.f32 %v799, %v800
    %v802 = vand.u32 %v801, 4294901760
    %803 = vmatpush1.msra.mxu0 %v802
    %804 = vmatprep.subr.mxu0 0.0
    %v805 = vand.u32 %v47, 4294901760
    %v806 = vsub.f32 %v47, %v805
    %v807 = vand.u32 %v806, 4294901760
    %v808 = vsub.f32 %v806, %v807
    %v809 = vand.u32 %v808, 4294901760
    %810 = vmatpush1.msra.mxu0 %v809
    %811 = vmatprep.subr.mxu0 0.0
    %v812 = vand.u32 %v48, 4294901760
    %v813 = vsub.f32 %v48, %v812
    %v814 = vand.u32 %v813, 4294901760
    %v815 = vsub.f32 %v813, %v814
    %v816 = vand.u32 %v815, 4294901760
    %817 = vmatpush1.msra.mxu0 %v816
    %818 = vmatprep.subr.mxu0 0.0
    %v819 = vand.u32 %v49, 4294901760
    %v820 = vsub.f32 %v49, %v819
    %v821 = vand.u32 %v820, 4294901760
    %v822 = vsub.f32 %v820, %v821
    %v823 = vand.u32 %v822, 4294901760
    %824 = vmatpush1.msra.mxu0 %v823
    %825 = vmatprep.subr.mxu0 0.0
    %v826 = vand.u32 %v50, 4294901760
    %v827 = vsub.f32 %v50, %v826
    %v828 = vand.u32 %v827, 4294901760
    %v829 = vsub.f32 %v827, %v828
    %v830 = vand.u32 %v829, 4294901760
    %831 = vmatpush1.msra.mxu0 %v830
    %832 = vmatprep.subr.mxu0 0.0
    %v833 = vand.u32 %v51, 4294901760
    %v834 = vsub.f32 %v51, %v833
    %v835 = vand.u32 %v834, 4294901760
    %v836 = vsub.f32 %v834, %v835
    %v837 = vand.u32 %v836, 4294901760
    %838 = vmatpush1.msra.mxu0 %v837
    %839 = vmatprep.subr.mxu0 0.0
    %v840 = vand.u32 %v52, 4294901760
    %v841 = vsub.f32 %v52, %v840
    %v842 = vand.u32 %v841, 4294901760
    %v843 = vsub.f32 %v841, %v842
    %v844 = vand.u32 %v843, 4294901760
    %845 = vmatpush1.msra.mxu0 %v844
    %846 = vmatprep.subr.mxu0 0.0
    %v847 = vand.u32 %v53, 4294901760
    %v848 = vsub.f32 %v53, %v847
    %v849 = vand.u32 %v848, 4294901760
    %v850 = vsub.f32 %v848, %v849
    %v851 = vand.u32 %v850, 4294901760
    %852 = vmatpush1.msra.mxu0 %v851
    %853 = vmatprep.subr.mxu0 0.0
    %v854 = vand.u32 %v54, 4294901760
    %v855 = vsub.f32 %v54, %v854
    %v856 = vand.u32 %v855, 4294901760
    %v857 = vsub.f32 %v855, %v856
    %v858 = vand.u32 %v857, 4294901760
    %859 = vmatpush1.msra.mxu0 %v858
    %860 = vmatprep.subr.mxu0 0.0
    %v861 = vand.u32 %v55, 4294901760
    %v862 = vsub.f32 %v55, %v861
    %v863 = vand.u32 %v862, 4294901760
    %v864 = vsub.f32 %v862, %v863
    %v865 = vand.u32 %v864, 4294901760
    %866 = vmatpush1.msra.mxu0 %v865
    %867 = vmatprep.subr.mxu0 0.0
    %v868 = vand.u32 %v56, 4294901760
    %v869 = vsub.f32 %v56, %v868
    %v870 = vand.u32 %v869, 4294901760
    %v871 = vsub.f32 %v869, %v870
    %v872 = vand.u32 %v871, 4294901760
    %873 = vmatpush1.msra.mxu0 %v872
    %874 = vmatprep.subr.mxu0 0.0
    %v875 = vand.u32 %v57, 4294901760
    %v876 = vsub.f32 %v57, %v875
    %v877 = vand.u32 %v876, 4294901760
    %v878 = vsub.f32 %v876, %v877
    %v879 = vand.u32 %v878, 4294901760
    %880 = vmatpush1.msra.mxu0 %v879
    %881 = vmatprep.subr.mxu0 0.0
    %v882 = vand.u32 %v58, 4294901760
    %v883 = vsub.f32 %v58, %v882
    %v884 = vand.u32 %v883, 4294901760
    %v885 = vsub.f32 %v883, %v884
    %v886 = vand.u32 %v885, 4294901760
    %887 = vmatpush1.msra.mxu0 %v886
    %888 = vmatprep.subr.mxu0 0.0
    %v889 = vand.u32 %v59, 4294901760
    %v890 = vsub.f32 %v59, %v889
    %v891 = vand.u32 %v890, 4294901760
    %v892 = vsub.f32 %v890, %v891
    %v893 = vand.u32 %v892, 4294901760
    %894 = vmatpush1.msra.mxu0 %v893
    %895 = vmatprep.subr.mxu0 0.0
    %v896 = vand.u32 %v60, 4294901760
    %v897 = vsub.f32 %v60, %v896
    %v898 = vand.u32 %v897, 4294901760
    %v899 = vsub.f32 %v897, %v898
    %v900 = vand.u32 %v899, 4294901760
    %901 = vmatpush1.msra.mxu0 %v900
    %902 = vmatprep.subr.mxu0 0.0
    %v903 = vand.u32 %v61, 4294901760
    %v904 = vsub.f32 %v61, %v903
    %v905 = vand.u32 %v904, 4294901760
    %v906 = vsub.f32 %v904, %v905
    %v907 = vand.u32 %v906, 4294901760
    %908 = vmatpush1.msra.mxu0 %v907
    %909 = vmatprep.subr.mxu0 0.0
    %910 = vmatpush1.msra.mxu0 0.0
    %911 = vmatprep.subr.mxu0 0.0
    %912 = vmatpush1.msra.mxu0 0.0
    %913 = vmatprep.subr.mxu0 0.0
    %914 = vmatpush1.msra.mxu0 0.0
    %915 = vmatprep.subr.mxu0 0.0
    %916 = vmatpush1.msra.mxu0 0.0
    %917 = vmatprep.subr.mxu0 0.0
    %918 = vmatpush1.msra.mxu0 0.0
    %919 = vmatprep.subr.mxu0 0.0
    %920 = vmatpush1.msra.mxu0 0.0
    %921 = vmatprep.subr.mxu0 0.0
    %922 = vmatpush1.msra.mxu0 0.0
    %923 = vmatprep.subr.mxu0 0.0
    %924 = vmatpush1.msra.mxu0 0.0
    %925 = vmatprep.subr.mxu0 0.0
    %926 = vmatpush1.msra.mxu0 0.0
    %927 = vmatprep.subr.mxu0 0.0
    %928 = vmatpush1.msra.mxu0 0.0
    %929 = vmatprep.subr.mxu0 0.0
    %930 = vmatpush1.msra.mxu0 0.0
    %931 = vmatprep.subr.mxu0 0.0
    %932 = vmatpush1.msra.mxu0 0.0
    %933 = vmatprep.subr.mxu0 0.0
    %934 = vmatpush1.msra.mxu0 0.0
    %935 = vmatprep.subr.mxu0 0.0
    %936 = vmatpush1.msra.mxu0 0.0
    %937 = vmatprep.subr.mxu0 0.0
    %938 = vmatpush1.msra.mxu0 0.0
    %939 = vmatprep.subr.mxu0 0.0
    %940 = vmatpush1.msra.mxu0 0.0
    %941 = vmatprep.mubr.f32.mxu0 0.0
    %v942 = vand.u32 %v705, 4294901760
    %943 = vmatmul.mubr.f32.gmra.mrb[0].mxu0 %v942
    %v944 = vpop.f32.mrb[0].mxu0
    %v945 = vadd.f32 %v794, %v944
    %v946 = vpop.f32.mrb[0].mxu0
    %947 = vdwg.mxu0
    %948 = vmatprep.subr.mxu0 0.0
    %v949 = vand.u32 %v46, 4294901760
    %v950 = vsub.f32 %v46, %v949
    %951 = vmatpush1.msra.mxu0 %v950
    %952 = vmatprep.subr.mxu0 0.0
    %v953 = vand.u32 %v47, 4294901760
    %v954 = vsub.f32 %v47, %v953
    %955 = vmatpush1.msra.mxu0 %v954
    %956 = vmatprep.subr.mxu0 0.0
    %v957 = vand.u32 %v48, 4294901760
    %v958 = vsub.f32 %v48, %v957
    %959 = vmatpush1.msra.mxu0 %v958
    %960 = vmatprep.subr.mxu0 0.0
    %v961 = vand.u32 %v49, 4294901760
    %v962 = vsub.f32 %v49, %v961
    %963 = vmatpush1.msra.mxu0 %v962
    %964 = vmatprep.subr.mxu0 0.0
    %v965 = vand.u32 %v50, 4294901760
    %v966 = vsub.f32 %v50, %v965
    %967 = vmatpush1.msra.mxu0 %v966
    %968 = vmatprep.subr.mxu0 0.0
    %v969 = vand.u32 %v51, 4294901760
    %v970 = vsub.f32 %v51, %v969
    %971 = vmatpush1.msra.mxu0 %v970
    %972 = vmatprep.subr.mxu0 0.0
    %v973 = vand.u32 %v52, 4294901760
    %v974 = vsub.f32 %v52, %v973
    %975 = vmatpush1.msra.mxu0 %v974
    %976 = vmatprep.subr.mxu0 0.0
    %v977 = vand.u32 %v53, 4294901760
    %v978 = vsub.f32 %v53, %v977
    %979 = vmatpush1.msra.mxu0 %v978
    %980 = vmatprep.subr.mxu0 0.0
    %v981 = vand.u32 %v54, 4294901760
    %v982 = vsub.f32 %v54, %v981
    %983 = vmatpush1.msra.mxu0 %v982
    %984 = vmatprep.subr.mxu0 0.0
    %v985 = vand.u32 %v55, 4294901760
    %v986 = vsub.f32 %v55, %v985
    %987 = vmatpush1.msra.mxu0 %v986
    %988 = vmatprep.subr.mxu0 0.0
    %v989 = vand.u32 %v56, 4294901760
    %v990 = vsub.f32 %v56, %v989
    %991 = vmatpush1.msra.mxu0 %v990
    %992 = vmatprep.subr.mxu0 0.0
    %v993 = vand.u32 %v57, 4294901760
    %v994 = vsub.f32 %v57, %v993
    %995 = vmatpush1.msra.mxu0 %v994
    %996 = vmatprep.subr.mxu0 0.0
    %v997 = vand.u32 %v58, 4294901760
    %v998 = vsub.f32 %v58, %v997
    %999 = vmatpush1.msra.mxu0 %v998
    %1000 = vmatprep.subr.mxu0 0.0
    %v1001 = vand.u32 %v59, 4294901760
    %v1002 = vsub.f32 %v59, %v1001
    %1003 = vmatpush1.msra.mxu0 %v1002
    %1004 = vmatprep.subr.mxu0 0.0
    %v1005 = vand.u32 %v60, 4294901760
    %v1006 = vsub.f32 %v60, %v1005
    %1007 = vmatpush1.msra.mxu0 %v1006
    %1008 = vmatprep.subr.mxu0 0.0
    %v1009 = vand.u32 %v61, 4294901760
    %v1010 = vsub.f32 %v61, %v1009
    %1011 = vmatpush1.msra.mxu0 %v1010
    %1012 = vmatprep.subr.mxu0 0.0
    %1013 = vmatpush1.msra.mxu0 0.0
    %1014 = vmatprep.subr.mxu0 0.0
    %1015 = vmatpush1.msra.mxu0 0.0
    %1016 = vmatprep.subr.mxu0 0.0
    %1017 = vmatpush1.msra.mxu0 0.0
    %1018 = vmatprep.subr.mxu0 0.0
    %1019 = vmatpush1.msra.mxu0 0.0
    %1020 = vmatprep.subr.mxu0 0.0
    %1021 = vmatpush1.msra.mxu0 0.0
    %1022 = vmatprep.subr.mxu0 0.0
    %1023 = vmatpush1.msra.mxu0 0.0
    %1024 = vmatprep.subr.mxu0 0.0
    %1025 = vmatpush1.msra.mxu0 0.0
    %1026 = vmatprep.subr.mxu0 0.0
    %1027 = vmatpush1.msra.mxu0 0.0
    %1028 = vmatprep.subr.mxu0 0.0
    %1029 = vmatpush1.msra.mxu0 0.0
    %1030 = vmatprep.subr.mxu0 0.0
    %1031 = vmatpush1.msra.mxu0 0.0
    %1032 = vmatprep.subr.mxu0 0.0
    %1033 = vmatpush1.msra.mxu0 0.0
    %1034 = vmatprep.subr.mxu0 0.0
    %1035 = vmatpush1.msra.mxu0 0.0
    %1036 = vmatprep.subr.mxu0 0.0
    %1037 = vmatpush1.msra.mxu0 0.0
    %1038 = vmatprep.subr.mxu0 0.0
    %1039 = vmatpush1.msra.mxu0 0.0
    %1040 = vmatprep.subr.mxu0 0.0
    %1041 = vmatpush1.msra.mxu0 0.0
    %1042 = vmatprep.subr.mxu0 0.0
    %1043 = vmatpush1.msra.mxu0 0.0
    %1044 = vmatprep.mubr.f32.mxu0 0.0
    %v1045 = vand.u32 %v705, 4294901760
    %v1046 = vsub.f32 %v705, %v1045
    %1047 = vmatmul.mubr.f32.gmra.mrb[0].mxu0 %v1046
    %v1048 = vpop.f32.mrb[0].mxu0
    %v1049 = vadd.f32 %v945, %v1048
    %v1050 = vpop.f32.mrb[0].mxu0
    %1051 = vdwg.mxu0
    %1052 = vmatprep.subr.mxu0 0.0
    %v1053 = vand.u32 %v46, 4294901760
    %1054 = vmatpush1.msra.mxu0 %v1053
    %1055 = vmatprep.subr.mxu0 0.0
    %v1056 = vand.u32 %v47, 4294901760
    %1057 = vmatpush1.msra.mxu0 %v1056
    %1058 = vmatprep.subr.mxu0 0.0
    %v1059 = vand.u32 %v48, 4294901760
    %1060 = vmatpush1.msra.mxu0 %v1059
    %1061 = vmatprep.subr.mxu0 0.0
    %v1062 = vand.u32 %v49, 4294901760
    %1063 = vmatpush1.msra.mxu0 %v1062
    %1064 = vmatprep.subr.mxu0 0.0
    %v1065 = vand.u32 %v50, 4294901760
    %1066 = vmatpush1.msra.mxu0 %v1065
    %1067 = vmatprep.subr.mxu0 0.0
    %v1068 = vand.u32 %v51, 4294901760
    %1069 = vmatpush1.msra.mxu0 %v1068
    %1070 = vmatprep.subr.mxu0 0.0
    %v1071 = vand.u32 %v52, 4294901760
    %1072 = vmatpush1.msra.mxu0 %v1071
    %1073 = vmatprep.subr.mxu0 0.0
    %v1074 = vand.u32 %v53, 4294901760
    %1075 = vmatpush1.msra.mxu0 %v1074
    %1076 = vmatprep.subr.mxu0 0.0
    %v1077 = vand.u32 %v54, 4294901760
    %1078 = vmatpush1.msra.mxu0 %v1077
    %1079 = vmatprep.subr.mxu0 0.0
    %v1080 = vand.u32 %v55, 4294901760
    %1081 = vmatpush1.msra.mxu0 %v1080
    %1082 = vmatprep.subr.mxu0 0.0
    %v1083 = vand.u32 %v56, 4294901760
    %1084 = vmatpush1.msra.mxu0 %v1083
    %1085 = vmatprep.subr.mxu0 0.0
    %v1086 = vand.u32 %v57, 4294901760
    %1087 = vmatpush1.msra.mxu0 %v1086
    %1088 = vmatprep.subr.mxu0 0.0
    %v1089 = vand.u32 %v58, 4294901760
    %1090 = vmatpush1.msra.mxu0 %v1089
    %1091 = vmatprep.subr.mxu0 0.0
    %v1092 = vand.u32 %v59, 4294901760
    %1093 = vmatpush1.msra.mxu0 %v1092
    %1094 = vmatprep.subr.mxu0 0.0
    %v1095 = vand.u32 %v60, 4294901760
    %1096 = vmatpush1.msra.mxu0 %v1095
    %1097 = vmatprep.subr.mxu0 0.0
    %v1098 = vand.u32 %v61, 4294901760
    %1099 = vmatpush1.msra.mxu0 %v1098
    %1100 = vmatprep.subr.mxu0 0.0
    %1101 = vmatpush1.msra.mxu0 0.0
    %1102 = vmatprep.subr.mxu0 0.0
    %1103 = vmatpush1.msra.mxu0 0.0
    %1104 = vmatprep.subr.mxu0 0.0
    %1105 = vmatpush1.msra.mxu0 0.0
    %1106 = vmatprep.subr.mxu0 0.0
    %1107 = vmatpush1.msra.mxu0 0.0
    %1108 = vmatprep.subr.mxu0 0.0
    %1109 = vmatpush1.msra.mxu0 0.0
    %1110 = vmatprep.subr.mxu0 0.0
    %1111 = vmatpush1.msra.mxu0 0.0
    %1112 = vmatprep.subr.mxu0 0.0
    %1113 = vmatpush1.msra.mxu0 0.0
    %1114 = vmatprep.subr.mxu0 0.0
    %1115 = vmatpush1.msra.mxu0 0.0
    %1116 = vmatprep.subr.mxu0 0.0
    %1117 = vmatpush1.msra.mxu0 0.0
    %1118 = vmatprep.subr.mxu0 0.0
    %1119 = vmatpush1.msra.mxu0 0.0
    %1120 = vmatprep.subr.mxu0 0.0
    %1121 = vmatpush1.msra.mxu0 0.0
    %1122 = vmatprep.subr.mxu0 0.0
    %1123 = vmatpush1.msra.mxu0 0.0
    %1124 = vmatprep.subr.mxu0 0.0
    %1125 = vmatpush1.msra.mxu0 0.0
    %1126 = vmatprep.subr.mxu0 0.0
    %1127 = vmatpush1.msra.mxu0 0.0
    %1128 = vmatprep.subr.mxu0 0.0
    %1129 = vmatpush1.msra.mxu0 0.0
    %1130 = vmatprep.subr.mxu0 0.0
    %1131 = vmatpush1.msra.mxu0 0.0
    %1132 = vmatprep.mubr.f32.mxu0 0.0
    %v1133 = vand.u32 %v705, 4294901760
    %v1134 = vsub.f32 %v705, %v1133
    %v1135 = vand.u32 %v1134, 4294901760
    %1136 = vmatmul.mubr.f32.gmra.mrb[0].mxu0 %v1135
    %v1137 = vpop.f32.mrb[0].mxu0
    %v1138 = vadd.f32 %v1049, %v1137
    %v1139 = vpop.f32.mrb[0].mxu0
    %1140 = vdwg.mxu0
    %1141 = vmatprep.subr.mxu0 0.0
    %v1142 = vand.u32 %v46, 4294901760
    %v1143 = vsub.f32 %v46, %v1142
    %v1144 = vand.u32 %v1143, 4294901760
    %1145 = vmatpush1.msra.mxu0 %v1144
    %1146 = vmatprep.subr.mxu0 0.0
    %v1147 = vand.u32 %v47, 4294901760
    %v1148 = vsub.f32 %v47, %v1147
    %v1149 = vand.u32 %v1148, 4294901760
    %1150 = vmatpush1.msra.mxu0 %v1149
    %1151 = vmatprep.subr.mxu0 0.0
    %v1152 = vand.u32 %v48, 4294901760
    %v1153 = vsub.f32 %v48, %v1152
    %v1154 = vand.u32 %v1153, 4294901760
    %1155 = vmatpush1.msra.mxu0 %v1154
    %1156 = vmatprep.subr.mxu0 0.0
    %v1157 = vand.u32 %v49, 4294901760
    %v1158 = vsub.f32 %v49, %v1157
    %v1159 = vand.u32 %v1158, 4294901760
    %1160 = vmatpush1.msra.mxu0 %v1159
    %1161 = vmatprep.subr.mxu0 0.0
    %v1162 = vand.u32 %v50, 4294901760
    %v1163 = vsub.f32 %v50, %v1162
    %v1164 = vand.u32 %v1163, 4294901760
    %1165 = vmatpush1.msra.mxu0 %v1164
    %1166 = vmatprep.subr.mxu0 0.0
    %v1167 = vand.u32 %v51, 4294901760
    %v1168 = vsub.f32 %v51, %v1167
    %v1169 = vand.u32 %v1168, 4294901760
    %1170 = vmatpush1.msra.mxu0 %v1169
    %1171 = vmatprep.subr.mxu0 0.0
    %v1172 = vand.u32 %v52, 4294901760
    %v1173 = vsub.f32 %v52, %v1172
    %v1174 = vand.u32 %v1173, 4294901760
    %1175 = vmatpush1.msra.mxu0 %v1174
    %1176 = vmatprep.subr.mxu0 0.0
    %v1177 = vand.u32 %v53, 4294901760
    %v1178 = vsub.f32 %v53, %v1177
    %v1179 = vand.u32 %v1178, 4294901760
    %1180 = vmatpush1.msra.mxu0 %v1179
    %1181 = vmatprep.subr.mxu0 0.0
    %v1182 = vand.u32 %v54, 4294901760
    %v1183 = vsub.f32 %v54, %v1182
    %v1184 = vand.u32 %v1183, 4294901760
    %1185 = vmatpush1.msra.mxu0 %v1184
    %1186 = vmatprep.subr.mxu0 0.0
    %v1187 = vand.u32 %v55, 4294901760
    %v1188 = vsub.f32 %v55, %v1187
    %v1189 = vand.u32 %v1188, 4294901760
    %1190 = vmatpush1.msra.mxu0 %v1189
    %1191 = vmatprep.subr.mxu0 0.0
    %v1192 = vand.u32 %v56, 4294901760
    %v1193 = vsub.f32 %v56, %v1192
    %v1194 = vand.u32 %v1193, 4294901760
    %1195 = vmatpush1.msra.mxu0 %v1194
    %1196 = vmatprep.subr.mxu0 0.0
    %v1197 = vand.u32 %v57, 4294901760
    %v1198 = vsub.f32 %v57, %v1197
    %v1199 = vand.u32 %v1198, 4294901760
    %1200 = vmatpush1.msra.mxu0 %v1199
    %1201 = vmatprep.subr.mxu0 0.0
    %v1202 = vand.u32 %v58, 4294901760
    %v1203 = vsub.f32 %v58, %v1202
    %v1204 = vand.u32 %v1203, 4294901760
    %1205 = vmatpush1.msra.mxu0 %v1204
    %1206 = vmatprep.subr.mxu0 0.0
    %v1207 = vand.u32 %v59, 4294901760
    %v1208 = vsub.f32 %v59, %v1207
    %v1209 = vand.u32 %v1208, 4294901760
    %1210 = vmatpush1.msra.mxu0 %v1209
    %1211 = vmatprep.subr.mxu0 0.0
    %v1212 = vand.u32 %v60, 4294901760
    %v1213 = vsub.f32 %v60, %v1212
    %v1214 = vand.u32 %v1213, 4294901760
    %1215 = vmatpush1.msra.mxu0 %v1214
    %1216 = vmatprep.subr.mxu0 0.0
    %v1217 = vand.u32 %v61, 4294901760
    %v1218 = vsub.f32 %v61, %v1217
    %v1219 = vand.u32 %v1218, 4294901760
    %1220 = vmatpush1.msra.mxu0 %v1219
    %1221 = vmatprep.subr.mxu0 0.0
    %1222 = vmatpush1.msra.mxu0 0.0
    %1223 = vmatprep.subr.mxu0 0.0
    %1224 = vmatpush1.msra.mxu0 0.0
    %1225 = vmatprep.subr.mxu0 0.0
    %1226 = vmatpush1.msra.mxu0 0.0
    %1227 = vmatprep.subr.mxu0 0.0
    %1228 = vmatpush1.msra.mxu0 0.0
    %1229 = vmatprep.subr.mxu0 0.0
    %1230 = vmatpush1.msra.mxu0 0.0
    %1231 = vmatprep.subr.mxu0 0.0
    %1232 = vmatpush1.msra.mxu0 0.0
    %1233 = vmatprep.subr.mxu0 0.0
    %1234 = vmatpush1.msra.mxu0 0.0
    %1235 = vmatprep.subr.mxu0 0.0
    %1236 = vmatpush1.msra.mxu0 0.0
    %1237 = vmatprep.subr.mxu0 0.0
    %1238 = vmatpush1.msra.mxu0 0.0
    %1239 = vmatprep.subr.mxu0 0.0
    %1240 = vmatpush1.msra.mxu0 0.0
    %1241 = vmatprep.subr.mxu0 0.0
    %1242 = vmatpush1.msra.mxu0 0.0
    %1243 = vmatprep.subr.mxu0 0.0
    %1244 = vmatpush1.msra.mxu0 0.0
    %1245 = vmatprep.subr.mxu0 0.0
    %1246 = vmatpush1.msra.mxu0 0.0
    %1247 = vmatprep.subr.mxu0 0.0
    %1248 = vmatpush1.msra.mxu0 0.0
    %1249 = vmatprep.subr.mxu0 0.0
    %1250 = vmatpush1.msra.mxu0 0.0
    %1251 = vmatprep.subr.mxu0 0.0
    %1252 = vmatpush1.msra.mxu0 0.0
    %1253 = vmatprep.mubr.f32.mxu0 0.0
    %v1254 = vand.u32 %v705, 4294901760
    %1255 = vmatmul.mubr.f32.gmra.mrb[0].mxu0 %v1254
    %v1256 = vpop.f32.mrb[0].mxu0
    %v1257 = vadd.f32 %v1138, %v1256
    %v1258 = vpop.f32.mrb[0].mxu0
    %1259 = vdwg.mxu0
    %1260 = vmatprep.subr.mxu0 0.0
    %v1261 = vand.u32 %v46, 4294901760
    %1262 = vmatpush1.msra.mxu0 %v1261
    %1263 = vmatprep.subr.mxu0 0.0
    %v1264 = vand.u32 %v47, 4294901760
    %1265 = vmatpush1.msra.mxu0 %v1264
    %1266 = vmatprep.subr.mxu0 0.0
    %v1267 = vand.u32 %v48, 4294901760
    %1268 = vmatpush1.msra.mxu0 %v1267
    %1269 = vmatprep.subr.mxu0 0.0
    %v1270 = vand.u32 %v49, 4294901760
    %1271 = vmatpush1.msra.mxu0 %v1270
    %1272 = vmatprep.subr.mxu0 0.0
    %v1273 = vand.u32 %v50, 4294901760
    %1274 = vmatpush1.msra.mxu0 %v1273
    %1275 = vmatprep.subr.mxu0 0.0
    %v1276 = vand.u32 %v51, 4294901760
    %1277 = vmatpush1.msra.mxu0 %v1276
    %1278 = vmatprep.subr.mxu0 0.0
    %v1279 = vand.u32 %v52, 4294901760
    %1280 = vmatpush1.msra.mxu0 %v1279
    %1281 = vmatprep.subr.mxu0 0.0
    %v1282 = vand.u32 %v53, 4294901760
    %1283 = vmatpush1.msra.mxu0 %v1282
    %1284 = vmatprep.subr.mxu0 0.0
    %v1285 = vand.u32 %v54, 4294901760
    %1286 = vmatpush1.msra.mxu0 %v1285
    %1287 = vmatprep.subr.mxu0 0.0
    %v1288 = vand.u32 %v55, 4294901760
    %1289 = vmatpush1.msra.mxu0 %v1288
    %1290 = vmatprep.subr.mxu0 0.0
    %v1291 = vand.u32 %v56, 4294901760
    %1292 = vmatpush1.msra.mxu0 %v1291
    %1293 = vmatprep.subr.mxu0 0.0
    %v1294 = vand.u32 %v57, 4294901760
    %1295 = vmatpush1.msra.mxu0 %v1294
    %1296 = vmatprep.subr.mxu0 0.0
    %v1297 = vand.u32 %v58, 4294901760
    %1298 = vmatpush1.msra.mxu0 %v1297
    %1299 = vmatprep.subr.mxu0 0.0
    %v1300 = vand.u32 %v59, 4294901760
    %1301 = vmatpush1.msra.mxu0 %v1300
    %1302 = vmatprep.subr.mxu0 0.0
    %v1303 = vand.u32 %v60, 4294901760
    %1304 = vmatpush1.msra.mxu0 %v1303
    %1305 = vmatprep.subr.mxu0 0.0
    %v1306 = vand.u32 %v61, 4294901760
    %1307 = vmatpush1.msra.mxu0 %v1306
    %1308 = vmatprep.subr.mxu0 0.0
    %1309 = vmatpush1.msra.mxu0 0.0
    %1310 = vmatprep.subr.mxu0 0.0
    %1311 = vmatpush1.msra.mxu0 0.0
    %1312 = vmatprep.subr.mxu0 0.0
    %1313 = vmatpush1.msra.mxu0 0.0
    %1314 = vmatprep.subr.mxu0 0.0
    %1315 = vmatpush1.msra.mxu0 0.0
    %1316 = vmatprep.subr.mxu0 0.0
    %1317 = vmatpush1.msra.mxu0 0.0
    %1318 = vmatprep.subr.mxu0 0.0
    %1319 = vmatpush1.msra.mxu0 0.0
    %1320 = vmatprep.subr.mxu0 0.0
    %1321 = vmatpush1.msra.mxu0 0.0
    %1322 = vmatprep.subr.mxu0 0.0
    %1323 = vmatpush1.msra.mxu0 0.0
    %1324 = vmatprep.subr.mxu0 0.0
    %1325 = vmatpush1.msra.mxu0 0.0
    %1326 = vmatprep.subr.mxu0 0.0
    %1327 = vmatpush1.msra.mxu0 0.0
    %1328 = vmatprep.subr.mxu0 0.0
    %1329 = vmatpush1.msra.mxu0 0.0
    %1330 = vmatprep.subr.mxu0 0.0
    %1331 = vmatpush1.msra.mxu0 0.0
    %1332 = vmatprep.subr.mxu0 0.0
    %1333 = vmatpush1.msra.mxu0 0.0
    %1334 = vmatprep.subr.mxu0 0.0
    %1335 = vmatpush1.msra.mxu0 0.0
    %1336 = vmatprep.subr.mxu0 0.0
    %1337 = vmatpush1.msra.mxu0 0.0
    %1338 = vmatprep.subr.mxu0 0.0
    %1339 = vmatpush1.msra.mxu0 0.0
    %1340 = vmatprep.mubr.f32.mxu0 0.0
    %v1341 = vand.u32 %v705, 4294901760
    %1342 = vmatmul.mubr.f32.gmra.mrb[0].mxu0 %v1341
    %v1343 = vpop.f32.mrb[0].mxu0
    %v1344 = vadd.f32 %v1257, %v1343
    %v1345 = vpop.f32.mrb[0].mxu0
    %1346 = vdwg.mxu0
    %v1347 = vmul.f32 %v1344, 0.03125
    %v1348 = vadd.f32 %v1347, 1e-05
    %v1349 = vrsqrt.pop %v1348
    %v1350 = vmul.f32 %v704, %v1349
    %v1351 = vlaneseq
    %v1352 = vshrl.u32 %v1351, 7
    %v1353 = vsub.s32 0, %v1352
    %v1354 = vrot.slane %v44, %v1353
    %v1355 = vmul.f32 %v1350, %v1354
    %v1356 = vlaneseq
    %v1357 = vshrl.u32 %v1356, 7
    %v1358 = vsub.s32 0, %v1357
    %v1359 = vrot.slane %v45, %v1358
    %v1360 = vadd.f32 %v1355, %v1359
    %1361 = vst [vmem:[#allocation7] sm:$0xff] %v1360
    // Predicated region
    $region22: #{tpu_custom_call.1} parent=1 // pred_check
      _
    $region23: #{tpu_custom_call.1} parent=1 // pred_check_branch
      %1363 = sbr.rel (0) target = $region25
    $region24: #{tpu_custom_call.1} parent=1 // pred_region
      %s1365 = ssub.s32 128, 64
      %1366 = vsyncadd [#allocation4], %s1365
      %s1367 = sshll.u32 [#allocation7], 4
      %s1368 = int_to_ptr.vmem [resolvable:$true] %s1367
      %1373 = dma.vmem_to_hbm [thread:$0]  %s1368, 64, %s3, [#allocation4], 64, 64, 4
    $region25: #{tpu_custom_call.1} parent=1 // pred_fallthru
      _
    // Predicated region
    $region26: #{tpu_custom_call.1} parent=1 // pred_check
      _
    $region27: #{tpu_custom_call.1} parent=1 // pred_check_branch
      %1375 = sbr.rel (0) target = $region29
    $region28: #{tpu_custom_call.1} parent=1 // pred_region
      %1376 = dma.done [#allocation4], 128
    $region29: #{tpu_custom_call.1} parent=1 // pred_fallthru
      _
    %1377 = vsyncpa [#allocation3], 1
    %1378 = vsyncpa [#allocation6], 1
    %1379 = vsyncpa [#allocation4], 1

</llo_original>
